<compile_context>
chip_gen: v5e
topology: v5e:2x2
jax: 0.10.0
libtpu: 0.0.40
codegen_flags: <defaults>
</compile_context>

<pallas_src>
import jax
import jax.numpy as jnp
from jax.experimental import pallas as pl
from jax.experimental.pallas import tpu as pltpu

CIN = 40
COUT = 960


def _sigmoid1pass(y):
    # Mathematically identical to sigmoid; single EUP (tanh) pass + 2 VPU ops.
    return 0.5 * jnp.tanh(0.5 * y) + 0.5


# ----------------------------------------------------------------------------
# Fast path kernel: rows on sublanes, COUT on lanes (lane-dense output writes).
# ----------------------------------------------------------------------------
def conv1x1_sigmoid_rows_kernel(x_ref, wt_ref, b_ref, o_ref):
    # x_ref:  [TR, CIN]   f32   (one row-tile, rows = batch pixels)
    # wt_ref: [CIN, COUT] bf16  (W^T, resident)
    # b_ref:  [1, COUT]   f32   (lane-dense bias row)
    # o_ref:  [TR, COUT]  f32
    y = jnp.dot(x_ref[...].astype(jnp.bfloat16), wt_ref[...],
                preferred_element_type=jnp.float32)
    y = y + b_ref[...]
    o_ref[...] = _sigmoid1pass(y).astype(o_ref.dtype)


# ----------------------------------------------------------------------------
# Large-spatial kernel: CIN/COUT on sublanes, pixels on lanes (NCHW direct).
# ----------------------------------------------------------------------------
def conv1x1_sigmoid_nchw_kernel(x_ref, w_ref, b_ref, o_ref):
    # x_ref: [CIN, TM]   f32   one column-tile of the NCHW feature map
    # w_ref: [COUT, CIN] bf16  resident across the whole grid
    # b_ref: [COUT, 1]   f32
    # o_ref: [COUT, TM]  f32   NCHW output tile, lane-dense (TM multiple of 128)
    y = jnp.dot(w_ref[...], x_ref[...].astype(jnp.bfloat16),
                preferred_element_type=jnp.float32)
    y = y + b_ref[...]                       # broadcast bias over pixel columns
    o_ref[...] = _sigmoid1pass(y).astype(o_ref.dtype)


def _pick_tm(m, n):
    # Lane-dense tile: multiple of 128.  Cap at 2048 (double-buffered f32 out
    # tiles ~15.7 MiB + f32 intermediate ~7.9 MiB + inputs/weights stays well
    # under the 48 MiB scoped-VMEM budget and v7x's 64 MiB physical VMEM).
    tm = ((min(m, 2048) + 127) // 128) * 128
    tm = max(tm, 128)
    # Megacore balance (v7x has 2 TCs): when N == 1, cap TM so grid_m >= 2.
    if n == 1 and m >= 256:
        half = (((m + 1) // 2) + 127) // 128 * 128
        tm = min(tm, half)
    return tm


def conv2d_1x1_sigmoid(x_nchw, weight, bias):
    """x_nchw: [N, CIN, H, W] f32
       weight: [COUT, CIN]    f32 (Conv2d weight [COUT, CIN, 1, 1] squeezed)
       bias:   [COUT]         f32
       returns [N, COUT, H, W] f32
    """
    N, C, H, W = x_nchw.shape
    assert C == CIN and weight.shape == (COUT, CIN)
    M = H * W
    w_bf16 = weight.astype(jnp.bfloat16)     # one-time cast in the wrapper

    if M == 1:
        # --------- small-spatial fast path (the module's real shape) ---------
        x2 = x_nchw.reshape(N, CIN)          # zero-copy (H*W == 1)
        wt = jnp.transpose(w_bf16)           # [CIN, COUT], tiny one-time op
        b_row = bias.reshape(1, COUT)

        TR = N if N <= 512 else 512          # row tile: full array or mult of 8
        grid_r = pl.cdiv(N, TR)

        out2 = pl.pallas_call(
            conv1x1_sigmoid_rows_kernel,
            out_shape=jax.ShapeDtypeStruct((N, COUT), jnp.float32),
            grid_spec=pltpu.PrefetchScalarGridSpec(
                num_scalar_prefetch=0,
                grid=(grid_r,),
                in_specs=[
                    pl.BlockSpec((TR, CIN), lambda r: (r, 0)),
                    pl.BlockSpec((CIN, COUT), lambda r: (0, 0)),
                    pl.BlockSpec((1, COUT), lambda r: (0, 0)),
                ],
                out_specs=pl.BlockSpec((TR, COUT), lambda r: (r, 0)),
            ),
            compiler_params=pltpu.CompilerParams(
                dimension_semantics=("parallel",),
                vmem_limit_bytes=32 * 1024 * 1024,
            ),
        )(x2, wt, b_row)
        return out2.reshape(N, COUT, 1, 1)   # zero-copy

    # ------------------------- large-spatial path ----------------------------
    TM = _pick_tm(M, N)
    grid_m = pl.cdiv(M, TM)                  # uneven last tile handled by Pallas

    x3 = x_nchw.reshape(N, CIN, M)           # pure reshape, stays NCHW-contiguous
    b2 = bias.reshape(COUT, 1)

    out3 = pl.pallas_call(
        conv1x1_sigmoid_nchw_kernel,
        out_shape=jax.ShapeDtypeStruct((N, COUT, M), jnp.float32),
        grid_spec=pltpu.PrefetchScalarGridSpec(
            num_scalar_prefetch=0,
            grid=(N, grid_m),
            in_specs=[
                # per-batch column tile of the input
                pl.BlockSpec((pl.Squeezed(), CIN, TM), lambda n, m: (n, 0, m)),
                # weight + bias: constant index map -> stay resident in VMEM
                pl.BlockSpec((COUT, CIN), lambda n, m: (0, 0)),
                pl.BlockSpec((COUT, 1), lambda n, m: (0, 0)),
            ],
            out_specs=pl.BlockSpec((pl.Squeezed(), COUT, TM),
                                   lambda n, m: (n, 0, m)),
        ),
        compiler_params=pltpu.CompilerParams(
            dimension_semantics=("parallel", "parallel"),
            vmem_limit_bytes=48 * 1024 * 1024,
        ),
    )(x3, w_bf16, b2)

    return out3.reshape(N, COUT, H, W)       # pure reshape, already NCHW


def _reference(x, weight, bias):
    return jax.nn.sigmoid(
        jnp.einsum('nchw,oc->nohw', x, weight) + bias.reshape(1, COUT, 1, 1)
    )


if __name__ == "__main__":
    key = jax.random.PRNGKey(0)
    k_x, k_w, k_b, k_x2, k_x3 = jax.random.split(key, 5)

    # Deterministic parameter init (mimic PyTorch Conv2d uniform 1/sqrt(fan_in))
    bound = 1.0 / (CIN ** 0.5)
    weight = jax.random.uniform(k_w, (COUT, CIN), minval=-bound, maxval=bound,
                                dtype=jnp.float32)
    bias = jax.random.uniform(k_b, (COUT,), minval=-bound, maxval=bound,
                              dtype=jnp.float32)

    # bf16 matmul operands (f32 accumulate) -> relaxed tolerance vs f32 ref.
    TOL = 1e-2

    # Primary test: exact module input shape [1, 40, 1, 1] (fast path)
    x = jax.random.normal(k_x, (1, CIN, 1, 1), dtype=jnp.float32)
    out = conv2d_1x1_sigmoid(x, weight, bias)
    jax.block_until_ready(out)
    ref = _reference(x, weight, bias)
    assert out.shape == (1, COUT, 1, 1)
    assert jnp.allclose(out, ref, atol=TOL), "mismatch vs reference (1x1 case)"

    # Secondary test: exercises the N axis of the large-spatial path
    x2 = jax.random.normal(k_x2, (2, CIN, 16, 16), dtype=jnp.float32)
    out2 = conv2d_1x1_sigmoid(x2, weight, bias)
    jax.block_until_ready(out2)
    ref2 = _reference(x2, weight, bias)
    assert out2.shape == (2, COUT, 16, 16)
    assert jnp.allclose(out2, ref2, atol=TOL), "mismatch vs reference (tiled case)"

    # Third test: N==1 megacore split + uneven last M tile (M=576, TM=384)
    x3 = jax.random.normal(k_x3, (1, CIN, 24, 24), dtype=jnp.float32)
    out3 = conv2d_1x1_sigmoid(x3, weight, bias)
    jax.block_until_ready(out3)
    ref3 = _reference(x3, weight, bias)
    assert out3.shape == (1, COUT, 24, 24)
    assert jnp.allclose(out3, ref3, atol=TOL), "mismatch vs reference (partial tile)"

    print("KERNEL_OK")
</pallas_src>

<mosaic_0001>
module attributes {stable_mosaic.version = 11 : i64} {
  func.func @conv1x1_sigmoid_rows_kernel(%arg0: i32, %arg1: memref<1x40xf32, #tpu.memory_space<vmem>>, %arg2: memref<40x960xbf16, #tpu.memory_space<vmem>>, %arg3: memref<1x960xf32, #tpu.memory_space<vmem>>, %arg4: memref<1x960xf32, #tpu.memory_space<vmem>>) attributes {dimension_semantics = [#tpu.dimension_semantics<parallel>], iteration_bounds = array<i64: 1>, scalar_prefetch = 0 : i64, scratch_operands = 0 : i64, tpu.core_type = #tpu.core_type<tc>, window_params = [{transform_indices = @transform_0, window_bounds = array<i64: 1, 40>}, {pipeline_mode = #tpu.pipeline_mode<synchronous>, transform_indices = @transform_1, window_bounds = array<i64: 40, 960>}, {pipeline_mode = #tpu.pipeline_mode<synchronous>, transform_indices = @transform_2, window_bounds = array<i64: 1, 960>}, {transform_indices = @transform_3, window_bounds = array<i64: 1, 960>}]} {
    %c0 = arith.constant 0 : index
    %c0_0 = arith.constant 0 : index
    %0 = vector.load %arg1[%c0, %c0_0] : memref<1x40xf32, #tpu.memory_space<vmem>>, vector<1x40xf32>
    %1 = arith.truncf %0 : vector<1x40xf32> to vector<1x40xbf16>
    %c0_1 = arith.constant 0 : index
    %c0_2 = arith.constant 0 : index
    %2 = vector.load %arg2[%c0_1, %c0_2] : memref<40x960xbf16, #tpu.memory_space<vmem>>, vector<40x960xbf16>
    %cst = arith.constant dense<0.000000e+00> : vector<1x960xf32>
    %3 = tpu.matmul %1, %2, %cst {dimension_numbers = #tpu.dot_dimension_numbers<[1], [0], [0], [1], [0, 0, 1, 1], [], []>} : vector<1x40xbf16>, vector<40x960xbf16>, vector<1x960xf32> -> vector<1x960xf32>
    %c0_3 = arith.constant 0 : index
    %c0_4 = arith.constant 0 : index
    %4 = vector.load %arg3[%c0_3, %c0_4] : memref<1x960xf32, #tpu.memory_space<vmem>>, vector<1x960xf32>
    %5 = arith.addf %3, %4 : vector<1x960xf32>
    %cst_5 = arith.constant 5.000000e-01 : f32
    %6 = vector.broadcast %cst_5 : f32 to vector<1x960xf32>
    %7 = arith.mulf %6, %5 : vector<1x960xf32>
    %8 = math.tanh %7 : vector<1x960xf32>
    %cst_6 = arith.constant 5.000000e-01 : f32
    %9 = vector.broadcast %cst_6 : f32 to vector<1x960xf32>
    %10 = arith.mulf %9, %8 : vector<1x960xf32>
    %cst_7 = arith.constant 5.000000e-01 : f32
    %11 = vector.broadcast %cst_7 : f32 to vector<1x960xf32>
    %12 = arith.addf %10, %11 : vector<1x960xf32>
    %c0_8 = arith.constant 0 : index
    %c0_9 = arith.constant 0 : index
    %13 = vector.load %arg4[%c0_8, %c0_9] : memref<1x960xf32, #tpu.memory_space<vmem>>, vector<1x960xf32>
    tpu.vector_store %arg4[%c0_8, %c0_9], %12 {strides = array<i32>} : memref<1x960xf32, #tpu.memory_space<vmem>>, vector<1x960xf32>,
    return
  }
  func.func @transform_0(%arg0: i32) -> (i32, i32) {
    %c0_i32 = arith.constant 0 : i32
    %c0_i32_0 = arith.constant 0 : i32
    return %arg0, %c0_i32 : i32, i32
  }
  func.func @transform_1(%arg0: i32) -> (i32, i32) {
    %c0_i32 = arith.constant 0 : i32
    %c0_i32_0 = arith.constant 0 : i32
    %c0_i32_1 = arith.constant 0 : i32
    return %c0_i32, %c0_i32_0 : i32, i32
  }
  func.func @transform_2(%arg0: i32) -> (i32, i32) {
    %c0_i32 = arith.constant 0 : i32
    %c0_i32_0 = arith.constant 0 : i32
    %c0_i32_1 = arith.constant 0 : i32
    return %c0_i32, %c0_i32_0 : i32, i32
  }
  func.func @transform_3(%arg0: i32) -> (i32, i32) {
    %c0_i32 = arith.constant 0 : i32
    %c0_i32_0 = arith.constant 0 : i32
    return %arg0, %c0_i32 : i32, i32
  }
}

</mosaic_0001>

<llo_original>
// kernel: tpu_custom_call.1
$region0: #{tpu_custom_call.1}
  #allocation0 [shape = 'u32[]', space=smem, size = 0x4, offset = 0x4, fixed_abs, tag = 'smem constant byte address 0x4 - core index']
  #allocation1 [shape = 'u32[72,128]{1,0:T(1,128)}', space=vmem, size = 0x9000, scoped, tag = 'internal scratch']
  %s0 = inlined_call_operand.hbm [shape: f32[1,40], index: 0, kind: input, shape index: {}]
  %s1 = inlined_call_operand.hbm [shape: bf16[40,960], index: 1, kind: input, shape index: {}]
  %s2 = inlined_call_operand.hbm [shape: f32[1,960], index: 2, kind: input, shape index: {}]
  %s3 = inlined_call_operand.hbm [shape: f32[1,960], index: 3, kind: output, shape index: {}]
  %s4 = sld [smem:[#allocation0]]
  $region34: #{tpu_custom_call.1} parent=0
    _
  %s6 = ssub.s32 1, %s4
  %s7 = scalar_select 0, %s6, %s4
  $region1: #{tpu_custom_call.1} parent=0
    #allocation2 [shape = 'u8[512]{0}', space=vmem, size = 0x400, scoped, tag = 'input window, operand 0, single buffered']
    #allocation3 [shape = 's32[1]{0}', space=sflag, size = 0x4, scoped, tag = 'scoped memory for tpu_custom_call.1']
    #allocation4 [shape = 's32[1]{0}', space=sflag, size = 0x4, scoped, tag = 'scoped memory for tpu_custom_call.1']
    #allocation5 [shape = 'u8[81920]{0}', space=vmem, size = 0x14000, scoped, tag = 'input window, operand 1, single buffered']
    #allocation6 [shape = 's32[1]{0}', space=sflag, size = 0x4, scoped, tag = 'scoped memory for tpu_custom_call.1']
    #allocation7 [shape = 'u8[4096]{0}', space=vmem, size = 0x1000, scoped, tag = 'input window, operand 2, single buffered']
    #allocation8 [shape = 'u8[4096]{0}', space=vmem, size = 0x1000, scoped, tag = 'output window, operand 0, single buffered']
    %8 = vsyncpa [#allocation3], 0
    %9 = vsyncpa [#allocation6], 0
    %10 = vsyncpa [#allocation4], 0
    // Predicated region
    $region2: #{tpu_custom_call.1} parent=1 // pred_check
      _
    $region3: #{tpu_custom_call.1} parent=1 // pred_check_branch
      %12 = sbr.rel (0) target = $region5
    $region4: #{tpu_custom_call.1} parent=1 // pred_region
      %14 = vsyncadd [#allocation3], 0
      %s16 = sshll.u32 %s0, 4
      %s17 = int_to_ptr.hbm [resolvable:$true] %s16
      %s18 = sshll.u32 [#allocation2], 4
      %s19 = int_to_ptr.vmem [resolvable:$true] %s18
      %21 = dma.hbm_to_vmem [thread:$0]  %s17, 16, %s19, [#allocation3]
    $region5: #{tpu_custom_call.1} parent=1 // pred_fallthru
      _
    // Predicated region
    $region6: #{tpu_custom_call.1} parent=1 // pred_check
      _
    $region7: #{tpu_custom_call.1} parent=1 // pred_check_branch
      %23 = sbr.rel (0) target = $region9
    $region8: #{tpu_custom_call.1} parent=1 // pred_region
      %25 = vsyncadd [#allocation6], 0
      %s26 = sshll.u32 %s1, 4
      %s27 = int_to_ptr.hbm [resolvable:$true] %s26
      %s28 = sshll.u32 [#allocation5], 4
      %s29 = int_to_ptr.vmem [resolvable:$true] %s28
      %34 = dma.hbm_to_vmem [thread:$0]  %s27, 2560, %s29, [#allocation6], 512, 512, 32
    $region9: #{tpu_custom_call.1} parent=1 // pred_fallthru
      _
    // Predicated region
    $region10: #{tpu_custom_call.1} parent=1 // pred_check
      _
    $region11: #{tpu_custom_call.1} parent=1 // pred_check_branch
      %36 = sbr.rel (0) target = $region13
    $region12: #{tpu_custom_call.1} parent=1 // pred_region
      %38 = vsyncadd [#allocation6], 0
      %s40 = sshll.u32 %s2, 4
      %s41 = int_to_ptr.hbm [resolvable:$true] %s40
      %s42 = sshll.u32 [#allocation7], 4
      %s43 = int_to_ptr.vmem [resolvable:$true] %s42
      %45 = dma.hbm_to_vmem [thread:$0]  %s41, 128, %s43, [#allocation6]
    $region13: #{tpu_custom_call.1} parent=1 // pred_fallthru
      _
    // Predicated region
    $region14: #{tpu_custom_call.1} parent=1 // pred_check
      _
    $region15: #{tpu_custom_call.1} parent=1 // pred_check_branch
      %47 = sbr.rel (0) target = $region17
    $region16: #{tpu_custom_call.1} parent=1 // pred_region
      %49 = dma.done [#allocation3], 16
    $region17: #{tpu_custom_call.1} parent=1 // pred_fallthru
      _
    // Predicated region
    $region18: #{tpu_custom_call.1} parent=1 // pred_check
      _
    $region19: #{tpu_custom_call.1} parent=1 // pred_check_branch
      %51 = sbr.rel (0) target = $region21
    $region20: #{tpu_custom_call.1} parent=1 // pred_region
      %53 = dma.done [#allocation6], 2560
    $region21: #{tpu_custom_call.1} parent=1 // pred_fallthru
      _
    // Predicated region
    $region22: #{tpu_custom_call.1} parent=1 // pred_check
      _
    $region23: #{tpu_custom_call.1} parent=1 // pred_check_branch
      %55 = sbr.rel (0) target = $region25
    $region24: #{tpu_custom_call.1} parent=1 // pred_region
      %57 = dma.done [#allocation6], 128
    $region25: #{tpu_custom_call.1} parent=1 // pred_fallthru
      _
    %v59 = vld [vmem:[#allocation2] sm:$0x1]
    %v60 = vpack.c.bf16 %v59, %v59
    %v61 = vld [vmem:[#allocation5] sm:$0xff]
    %v62 = vld [vmem:[#allocation5 + $0x8] sm:$0xff]
    %v63 = vld [vmem:[#allocation5 + $0x10] sm:$0xff]
    %v64 = vld [vmem:[#allocation5 + $0x18] sm:$0xff]
    %v65 = vld [vmem:[#allocation5 + $0x20] sm:$0xff]
    %v66 = vld [vmem:[#allocation5 + $0x28] sm:$0xff]
    %v67 = vld [vmem:[#allocation5 + $0x30] sm:$0xff]
    %v68 = vld [vmem:[#allocation5 + $0x38] sm:$0xff]
    %v69 = vld [vmem:[#allocation5 + $0x40] sm:$0xff]
    %v70 = vld [vmem:[#allocation5 + $0x48] sm:$0xff]
    %v71 = vld [vmem:[#allocation5 + $0x50] sm:$0xff]
    %v72 = vld [vmem:[#allocation5 + $0x58] sm:$0xff]
    %v73 = vld [vmem:[#allocation5 + $0x60] sm:$0xff]
    %v74 = vld [vmem:[#allocation5 + $0x68] sm:$0xff]
    %v75 = vld [vmem:[#allocation5 + $0x70] sm:$0xff]
    %v76 = vld [vmem:[#allocation5 + $0x78] sm:$0xff]
    %v77 = vld [vmem:[#allocation5 + $0x80] sm:$0xff]
    %v78 = vld [vmem:[#allocation5 + $0x88] sm:$0xff]
    %v79 = vld [vmem:[#allocation5 + $0x90] sm:$0xff]
    %v80 = vld [vmem:[#allocation5 + $0x98] sm:$0xff]
    %v81 = vld [vmem:[#allocation7] sm:$0xff]
    %v102 = vunpack.c.l.b16 %v61
    %v103 = vunpack.c.h.b16 %v61
    %v104 = vunpack.c.l.b16 %v62
    %v105 = vunpack.c.h.b16 %v62
    %v106 = vunpack.c.l.b16 %v63
    %v107 = vunpack.c.h.b16 %v63
    %v108 = vunpack.c.l.b16 %v64
    %v109 = vunpack.c.h.b16 %v64
    %v110 = vunpack.c.l.b16 %v65
    %v111 = vunpack.c.h.b16 %v65
    %v112 = vunpack.c.l.b16 %v66
    %v113 = vunpack.c.h.b16 %v66
    %v114 = vunpack.c.l.b16 %v67
    %v115 = vunpack.c.h.b16 %v67
    %v116 = vunpack.c.l.b16 %v68
    %v117 = vunpack.c.h.b16 %v68
    %v118 = vunpack.c.l.b16 %v69
    %v119 = vunpack.c.h.b16 %v69
    %v120 = vunpack.c.l.b16 %v70
    %v121 = vunpack.c.h.b16 %v70
    %v122 = vunpack.c.l.b16 %v71
    %v123 = vunpack.c.h.b16 %v71
    %v124 = vunpack.c.l.b16 %v72
    %v125 = vunpack.c.h.b16 %v72
    %v126 = vunpack.c.l.b16 %v73
    %v127 = vunpack.c.h.b16 %v73
    %v128 = vunpack.c.l.b16 %v74
    %v129 = vunpack.c.h.b16 %v74
    %v130 = vunpack.c.l.b16 %v75
    %v131 = vunpack.c.h.b16 %v75
    %v132 = vunpack.c.l.b16 %v76
    %v133 = vunpack.c.h.b16 %v76
    %v134 = vunpack.c.l.b16 %v77
    %v135 = vunpack.c.h.b16 %v77
    %v136 = vunpack.c.l.b16 %v78
    %v137 = vunpack.c.h.b16 %v78
    %v138 = vunpack.c.l.b16 %v79
    %v139 = vunpack.c.h.b16 %v79
    %v140 = vunpack.c.l.b16 %v80
    %v141 = vunpack.c.h.b16 %v80
    %v142 = vpack.c.b16 %v110, %v102
    %v143 = vpack.c.b16 %v111, %v103
    %v144 = vpack.c.b16 %v112, %v104
    %v145 = vpack.c.b16 %v113, %v105
    %v146 = vpack.c.b16 %v114, %v106
    %v147 = vpack.c.b16 %v115, %v107
    %v148 = vpack.c.b16 %v116, %v108
    %v149 = vpack.c.b16 %v117, %v109
    %v150 = vpack.c.b16 %v126, %v118
    %v151 = vpack.c.b16 %v127, %v119
    %v152 = vpack.c.b16 %v128, %v120
    %v153 = vpack.c.b16 %v129, %v121
    %v154 = vpack.c.b16 %v130, %v122
    %v155 = vpack.c.b16 %v131, %v123
    %v156 = vpack.c.b16 %v132, %v124
    %v157 = vpack.c.b16 %v133, %v125
    %v158 = vpack.c.b16 %v134, %v134
    %v159 = vpack.c.b16 %v135, %v135
    %v160 = vpack.c.b16 %v136, %v136
    %v161 = vpack.c.b16 %v137, %v137
    %v162 = vpack.c.b16 %v138, %v138
    %v163 = vpack.c.b16 %v139, %v139
    %v164 = vpack.c.b16 %v140, %v140
    %v165 = vpack.c.b16 %v141, %v141
    %v183 = vperm.slane %v81, 0
    %v184 = vperm.slane %v81, 1
    %v185 = vperm.slane %v81, 2
    %v186 = vperm.slane %v81, 3
    %v187 = vperm.slane %v81, 4
    %v188 = vperm.slane %v81, 5
    %v189 = vperm.slane %v81, 6
    %v190 = vperm.slane %v81, 7
    %vm199 = vcmask 326656
    %v201 = vsel %vm199, %v60, 0
    %vm203 = vcmask 1043456
    %v205 = vsel %vm203, %v158, 0
    %v208 = vsel %vm203, %v159, 0
    %v211 = vsel %vm203, %v160, 0
    %v214 = vsel %vm203, %v161, 0
    %v217 = vsel %vm203, %v162, 0
    %v220 = vsel %vm203, %v163, 0
    %v223 = vsel %vm203, %v164, 0
    %v226 = vsel %vm203, %v165, 0
    %228 = vmatpush.bf16.msra.mxu0 0
    %229 = vmatpush.bf16.msra.mxu0 0
    %230 = vmatpush.bf16.msra.mxu0 0
    %231 = vmatpush.bf16.msra.mxu0 0
    %232 = vmatpush.bf16.msra.mxu0 0
    %233 = vmatpush.bf16.msra.mxu0 %v205
    %234 = vmatpush.bf16.msra.mxu0 %v150
    %235 = vmatpush.bf16.msra.mxu0 %v142
    %236 = vmatmul.bf16.gmra.mxu0 %v201
    %v237 = vpop.f32.mrf.mxu0
    %v238 = vadd.f32 %v183, %v237
    %v239 = vpop.f32.mrf.mxu0
    %240 = vdwg.mxu0
    %241 = vmatpush.bf16.msra.mxu0 0
    %242 = vmatpush.bf16.msra.mxu0 0
    %243 = vmatpush.bf16.msra.mxu0 0
    %244 = vmatpush.bf16.msra.mxu0 0
    %245 = vmatpush.bf16.msra.mxu0 0
    %246 = vmatpush.bf16.msra.mxu0 %v208
    %247 = vmatpush.bf16.msra.mxu0 %v151
    %248 = vmatpush.bf16.msra.mxu0 %v143
    %249 = vmatmul.bf16.gmra.mxu0 %v201
    %v250 = vpop.f32.mrf.mxu0
    %v251 = vadd.f32 %v184, %v250
    %v252 = vpop.f32.mrf.mxu0
    %253 = vdwg.mxu0
    %254 = vmatpush.bf16.msra.mxu0 0
    %255 = vmatpush.bf16.msra.mxu0 0
    %256 = vmatpush.bf16.msra.mxu0 0
    %257 = vmatpush.bf16.msra.mxu0 0
    %258 = vmatpush.bf16.msra.mxu0 0
    %259 = vmatpush.bf16.msra.mxu0 %v211
    %260 = vmatpush.bf16.msra.mxu0 %v152
    %261 = vmatpush.bf16.msra.mxu0 %v144
    %262 = vmatmul.bf16.gmra.mxu0 %v201
    %v263 = vpop.f32.mrf.mxu0
    %v264 = vadd.f32 %v185, %v263
    %v265 = vpop.f32.mrf.mxu0
    %266 = vdwg.mxu0
    %267 = vmatpush.bf16.msra.mxu0 0
    %268 = vmatpush.bf16.msra.mxu0 0
    %269 = vmatpush.bf16.msra.mxu0 0
    %270 = vmatpush.bf16.msra.mxu0 0
    %271 = vmatpush.bf16.msra.mxu0 0
    %272 = vmatpush.bf16.msra.mxu0 %v214
    %273 = vmatpush.bf16.msra.mxu0 %v153
    %274 = vmatpush.bf16.msra.mxu0 %v145
    %275 = vmatmul.bf16.gmra.mxu0 %v201
    %v276 = vpop.f32.mrf.mxu0
    %v277 = vadd.f32 %v186, %v276
    %v278 = vpop.f32.mrf.mxu0
    %279 = vdwg.mxu0
    %280 = vmatpush.bf16.msra.mxu0 0
    %281 = vmatpush.bf16.msra.mxu0 0
    %282 = vmatpush.bf16.msra.mxu0 0
    %283 = vmatpush.bf16.msra.mxu0 0
    %284 = vmatpush.bf16.msra.mxu0 0
    %285 = vmatpush.bf16.msra.mxu0 %v217
    %286 = vmatpush.bf16.msra.mxu0 %v154
    %287 = vmatpush.bf16.msra.mxu0 %v146
    %288 = vmatmul.bf16.gmra.mxu0 %v201
    %v289 = vpop.f32.mrf.mxu0
    %v290 = vadd.f32 %v187, %v289
    %v291 = vpop.f32.mrf.mxu0
    %292 = vdwg.mxu0
    %293 = vmatpush.bf16.msra.mxu0 0
    %294 = vmatpush.bf16.msra.mxu0 0
    %295 = vmatpush.bf16.msra.mxu0 0
    %296 = vmatpush.bf16.msra.mxu0 0
    %297 = vmatpush.bf16.msra.mxu0 0
    %298 = vmatpush.bf16.msra.mxu0 %v220
    %299 = vmatpush.bf16.msra.mxu0 %v155
    %300 = vmatpush.bf16.msra.mxu0 %v147
    %301 = vmatmul.bf16.gmra.mxu0 %v201
    %v302 = vpop.f32.mrf.mxu0
    %v303 = vadd.f32 %v188, %v302
    %v304 = vpop.f32.mrf.mxu0
    %305 = vdwg.mxu0
    %306 = vmatpush.bf16.msra.mxu0 0
    %307 = vmatpush.bf16.msra.mxu0 0
    %308 = vmatpush.bf16.msra.mxu0 0
    %309 = vmatpush.bf16.msra.mxu0 0
    %310 = vmatpush.bf16.msra.mxu0 0
    %311 = vmatpush.bf16.msra.mxu0 %v223
    %312 = vmatpush.bf16.msra.mxu0 %v156
    %313 = vmatpush.bf16.msra.mxu0 %v148
    %314 = vmatmul.bf16.gmra.mxu0 %v201
    %v315 = vpop.f32.mrf.mxu0
    %v316 = vadd.f32 %v189, %v315
    %v317 = vpop.f32.mrf.mxu0
    %318 = vdwg.mxu0
    %319 = vmatpush.bf16.msra.mxu0 0
    %320 = vmatpush.bf16.msra.mxu0 0
    %321 = vmatpush.bf16.msra.mxu0 0
    %322 = vmatpush.bf16.msra.mxu0 0
    %323 = vmatpush.bf16.msra.mxu0 0
    %324 = vmatpush.bf16.msra.mxu0 %v226
    %325 = vmatpush.bf16.msra.mxu0 %v157
    %326 = vmatpush.bf16.msra.mxu0 %v149
    %327 = vmatmul.bf16.gmra.mxu0 %v201
    %v328 = vpop.f32.mrf.mxu0
    %v329 = vadd.f32 %v190, %v328
    %v330 = vpop.f32.mrf.mxu0
    %331 = vdwg.mxu0
    %v332 = vmul.f32 %v238, 0.5
    %v333 = vmul.f32 %v251, 0.5
    %v334 = vmul.f32 %v264, 0.5
    %v335 = vmul.f32 %v277, 0.5
    %v336 = vmul.f32 %v290, 0.5
    %v337 = vmul.f32 %v303, 0.5
    %v338 = vmul.f32 %v316, 0.5
    %v339 = vmul.f32 %v329, 0.5
    %v340 = vtanh.pop %v332
    %v341 = vtanh.pop %v333
    %v342 = vtanh.pop %v334
    %v343 = vtanh.pop %v335
    %v344 = vtanh.pop %v336
    %v345 = vtanh.pop %v337
    %v346 = vtanh.pop %v338
    %v347 = vtanh.pop %v339
    %v348 = vmul.f32 %v340, 0.5
    %v349 = vmul.f32 %v341, 0.5
    %v350 = vmul.f32 %v342, 0.5
    %v351 = vmul.f32 %v343, 0.5
    %v352 = vmul.f32 %v344, 0.5
    %v353 = vmul.f32 %v345, 0.5
    %v354 = vmul.f32 %v346, 0.5
    %v355 = vmul.f32 %v347, 0.5
    %v356 = vadd.f32 %v348, 0.5
    %v357 = vadd.f32 %v349, 0.5
    %v358 = vadd.f32 %v350, 0.5
    %v359 = vadd.f32 %v351, 0.5
    %v360 = vadd.f32 %v352, 0.5
    %v361 = vadd.f32 %v353, 0.5
    %v362 = vadd.f32 %v354, 0.5
    %v363 = vadd.f32 %v355, 0.5
    %v372 = vrot.slane %v357, 7
    %v373 = vrot.slane %v358, 6
    %v374 = vrot.slane %v359, 5
    %v375 = vrot.slane %v360, 4
    %v376 = vrot.slane %v361, 3
    %v377 = vrot.slane %v362, 2
    %v378 = vrot.slane %v363, 1
    %vm379 = vcmask 1040384
    %v380 = vsel %vm379, %v356, %v372
    %vm381 = vcmask 1042434
    %v382 = vsel %vm381, %v373, %v374
    %vm383 = vcmask 1041408
    %v384 = vsel %vm383, %v380, %v382
    %vm385 = vcmask 1044484
    %v386 = vsel %vm385, %v375, %v376
    %vm387 = vcmask 1046534
    %v388 = vsel %vm387, %v377, %v378
    %vm389 = vcmask 1045508
    %v390 = vsel %vm389, %v386, %v388
    %v391 = vsel %vm203, %v384, %v390
    %v393 = vlaneseq
    %vm394 = vcmp.ge.s32.totalorder %v393, 0
    %vm395 = vcmp.lt.s32.totalorder %v393, 960
    %vm396 = vmand %vm394, %vm395
    %397 = vst.msk [vmem:[#allocation8] sm:$0xff] %vm396, %v391
    // Predicated region
    $region26: #{tpu_custom_call.1} parent=1 // pred_check
      _
    $region27: #{tpu_custom_call.1} parent=1 // pred_check_branch
      %399 = sbr.rel (0) target = $region29
    $region28: #{tpu_custom_call.1} parent=1 // pred_region
      %401 = vsyncadd [#allocation4], 0
      %s403 = sshll.u32 [#allocation8], 4
      %s404 = int_to_ptr.vmem [resolvable:$true] %s403
      %s405 = sshll.u32 %s3, 4
      %s406 = int_to_ptr.hbm [resolvable:$true] %s405
      %408 = dma.vmem_to_hbm [thread:$0]  %s404, 128, %s406, [#allocation4]
    $region29: #{tpu_custom_call.1} parent=1 // pred_fallthru
      _
    // Predicated region
    $region30: #{tpu_custom_call.1} parent=1 // pred_check
      _
    $region31: #{tpu_custom_call.1} parent=1 // pred_check_branch
      %410 = sbr.rel (0) target = $region33
    $region32: #{tpu_custom_call.1} parent=1 // pred_region
      %412 = dma.done [#allocation4], 128
    $region33: #{tpu_custom_call.1} parent=1 // pred_fallthru
      _
    %413 = vsyncpa [#allocation3], 1
    %414 = vsyncpa [#allocation6], 1
    %415 = vsyncpa [#allocation4], 1

</llo_original>
